<compile_context>
chip_gen: v5e
topology: v5e:2x2
jax: 0.10.0
libtpu: 0.0.40
codegen_flags: <defaults>
</compile_context>

<pallas_src>
import functools

import jax
import jax.numpy as jnp
from jax import lax
from jax.experimental import pallas as pl
from jax.experimental.pallas import tpu as pltpu


def _round_up(x, m):
    return (x + m - 1) // m * m


# ----------------------------------------------------------------------------
# Kernel 1: nodevec pre-pass   v = tanh(alpha * (E @ W^T + b)), padded rows = 0
# ----------------------------------------------------------------------------
def _nodevec_kernel(e_ref, wt_ref, b_ref, v_ref, *, alpha, n_valid):
    # e_ref:  (N8, Dp)  gathered embeddings, rows >= n_valid are zero
    # wt_ref: (Dp, Dp)  lin1 weight pre-transposed to (in, out), zero padded
    # b_ref:  (1,  Dp)  lin1 bias, zero padded
    # v_ref:  (N8, Dp)  nodevec; rows >= n_valid forced to exactly 0
    h = jnp.dot(e_ref[...], wt_ref[...], preferred_element_type=jnp.float32)
    v = jnp.tanh(alpha * (h + b_ref[...]))
    row = lax.broadcasted_iota(jnp.int32, (v.shape[0], 1), 0)
    v_ref[...] = jnp.where(row < n_valid, v, 0.0)


# ----------------------------------------------------------------------------
# Kernel 2: row tile of adj = relu(tanh(alpha * v_row @ v_all^T)) + top-k mask
# ----------------------------------------------------------------------------
def _adj_topk_kernel(v_row_ref, v_all_ref, o_ref, *, alpha, k, n_valid):
    # v_row_ref: (TM, Dp)   row tile of nodevec (LHS)
    # v_all_ref: (Nc, Dp)   full nodevec, grid-invariant (RHS of the NT matmul)
    # o_ref:     (TM, Nc)   top-k-masked adjacency row tile
    v_row = v_row_ref[...]
    v_all = v_all_ref[...]

    # a = v_row @ v_all^T  -- NT matmul on the MXU, no materialized transpose.
    a = lax.dot_general(v_row, v_all, (((1,), (1,)), ((), ())),
                        preferred_element_type=jnp.float32)
    # Padded columns of v_all are exactly zero rows -> adj padded cols == 0.
    adj = jnp.maximum(jnp.tanh(alpha * a), 0.0)          # (TM, Nc), >= 0

    nc = adj.shape[-1]
    col_bits = max(1, (n_valid - 1).bit_length())
    low_mask = (1 << col_bits) - 1

    # Keyed top-k: adj >= 0 so its int32 bit pattern is order-preserving.
    # Replace the low `col_bits` mantissa bits with (n_valid-1-col) so a single
    # max-reduce returns the largest value with lowest-column tie-break, and
    # every key in a row is unique (exactly one column selected per step).
    col = lax.broadcasted_iota(jnp.int32, (1, nc), 1)     # (1, Nc) row, no NxN iota
    col_key = jnp.maximum((n_valid - 1) - col, 0)         # padded cols clamp to 0
    key = (pltpu.bitcast(adj, jnp.int32) & ~low_mask) | col_key

    out = jnp.zeros(adj.shape, dtype=jnp.float32)
    for _ in range(k):                                    # k is a small static const
        cur = jnp.max(key, axis=-1, keepdims=True)        # one XLU row reduce
        sel = key == cur                                  # unique winner per row
        out = jnp.where(sel, adj, out)                    # write value directly
        key = jnp.where(sel, -1, key)                     # kill it (all keys >= 0)

    o_ref[...] = out


# ----------------------------------------------------------------------------
# Wrapper
# ----------------------------------------------------------------------------
def graph_undirected(emb_weight, lin_weight, lin_bias, idx, *, k, alpha=3.0):
    """Pallas forward of MTGNN GraphUndirected (embedding branch).

    emb_weight: (nnodes, dim) embedding table (emb1.weight)
    lin_weight: (dim, dim)    nn.Linear weight, (out, in) layout
    lin_bias:   (dim,)        nn.Linear bias
    idx:        (N,) int      selected node indices
    returns:    (N, N) float32 top-k-masked adjacency
    """
    n = int(idx.shape[0])
    dim = int(emb_weight.shape[1])
    assert 1 <= k <= n

    d_pad = _round_up(dim, 128)           # lane dims: multiple of 128
    n8 = _round_up(n, 8)                  # sublane dims: multiple of 8 (f32)
    n_cols = _round_up(n, 128)            # output last dim / RHS row count
    tm = n8 if n8 <= 256 else 128         # row tile; >1 step only when n > 256
    n_rows = _round_up(n, tm)

    # Glue: embedding gather + one-time weight transpose + zero pads.
    e = emb_weight[idx].astype(jnp.float32)                     # (N, dim)
    e = jnp.pad(e, ((0, n8 - n), (0, d_pad - dim)))
    wt = jnp.pad(lin_weight.astype(jnp.float32).T,
                 ((0, d_pad - dim), (0, d_pad - dim)))
    b = jnp.pad(lin_bias.astype(jnp.float32).reshape(1, dim),
                ((0, 0), (0, d_pad - dim)))

    # --- pre-pass: nodevec (tiny; single grid step) --------------------------
    v = pl.pallas_call(
        functools.partial(_nodevec_kernel, alpha=float(alpha), n_valid=n),
        out_shape=jax.ShapeDtypeStruct((n8, d_pad), jnp.float32),
        grid_spec=pltpu.PrefetchScalarGridSpec(
            num_scalar_prefetch=0,
            grid=(1,),
            in_specs=[
                pl.BlockSpec((n8, d_pad), lambda i: (0, 0)),
                pl.BlockSpec((d_pad, d_pad), lambda i: (0, 0)),
                pl.BlockSpec((1, d_pad), lambda i: (0, 0)),
            ],
            out_specs=pl.BlockSpec((n8, d_pad), lambda i: (0, 0)),
        ),
        compiler_params=pltpu.CompilerParams(
            dimension_semantics=("arbitrary",)),
    )(e, wt, b)

    # Two row-padded views of v: LHS tiles (rows multiple of tm) and the
    # grid-invariant RHS copy (rows = output column count, multiple of 128).
    # Padded rows are exactly zero (kernel 1 masks them), so padded output
    # rows/cols are exactly zero too -- no garbage, no extra mask pass.
    v_lhs = jnp.pad(v, ((0, n_rows - n8), (0, 0)))
    v_rhs = jnp.pad(v, ((0, n_cols - n8), (0, 0)))

    # Explicit VMEM budget (re-derived so a v6e tiling can't OOM on v7x's
    # 64 MiB): blocks (double-buffered) + ~6 live (TM, Nc) f32 temporaries,
    # 2x headroom, clamped to [16 MiB, 48 MiB].
    est = 4 * (2 * tm * d_pad + 2 * n_cols * d_pad
               + 2 * tm * n_cols + 6 * tm * n_cols)
    vmem_limit = int(min(max(2 * est, 16 << 20), 48 << 20))

    cost = pl.CostEstimate(
        flops=int(2 * n_rows * n_cols * d_pad + (4 * k + 4) * n_rows * n_cols),
        transcendentals=int(n_rows * n_cols),
        bytes_accessed=int(4 * (n_rows * d_pad + n_cols * d_pad
                                + n_rows * n_cols)),
    )

    out = pl.pallas_call(
        functools.partial(_adj_topk_kernel, alpha=float(alpha), k=int(k),
                          n_valid=n),
        out_shape=jax.ShapeDtypeStruct((n_rows, n_cols), jnp.float32),
        grid_spec=pltpu.PrefetchScalarGridSpec(
            num_scalar_prefetch=0,
            grid=(n_rows // tm,),
            in_specs=[
                # Row tile of v (changes every step).
                pl.BlockSpec((tm, d_pad), lambda i: (i, 0)),
                # Full v (grid-invariant index_map -> fetched once; its
                # double-buffer cost is negligible at these block sizes).
                pl.BlockSpec((n_cols, d_pad), lambda i: (0, 0)),
            ],
            out_specs=pl.BlockSpec((tm, n_cols), lambda i: (i, 0)),
        ),
        compiler_params=pltpu.CompilerParams(
            dimension_semantics=("parallel",),   # lets v7x split rows over 2 TCs
            vmem_limit_bytes=vmem_limit),
        cost_estimate=cost,
    )(v_lhs, v_rhs)

    return out[:n, :n]


# ----------------------------------------------------------------------------
# Pure-JAX reference (mirrors the PyTorch module)
# ----------------------------------------------------------------------------
def _reference(emb_weight, lin_weight, lin_bias, idx, *, k, alpha=3.0):
    hi = jax.lax.Precision.HIGHEST
    e = emb_weight[idx].astype(jnp.float32)
    v = jnp.tanh(alpha * (jnp.dot(e, lin_weight.T, precision=hi) + lin_bias))
    a = jnp.dot(v, v.T, precision=hi)
    adj = jax.nn.relu(jnp.tanh(alpha * a))
    _, cols = lax.top_k(adj, k)                       # lowest-index tie-break
    rows = jnp.arange(adj.shape[0])[:, None]
    mask = jnp.zeros_like(adj).at[rows, cols].set(1.0)
    return adj * mask


if __name__ == "__main__":
    key = jax.random.PRNGKey(0)
    k_emb, k_w, k_b, k_idx = jax.random.split(key, 4)

    nnodes, dim = 20, 32          # small shapes consistent with MTGNN usage
    n_sel, topk, alpha = 16, 4, 3.0

    # Modest parameter scales keep tanh(alpha * .) out of its saturated
    # plateau, so the top-k boundary has well-separated values (no near-ties).
    emb_weight = 0.15 * jax.random.normal(k_emb, (nnodes, dim), dtype=jnp.float32)
    lin_weight = 0.10 * jax.random.normal(k_w, (dim, dim), dtype=jnp.float32)
    lin_bias = 0.05 * jax.random.normal(k_b, (dim,), dtype=jnp.float32)
    idx = jax.random.permutation(k_idx, nnodes)[:n_sel].astype(jnp.int32)

    out = graph_undirected(emb_weight, lin_weight, lin_bias, idx,
                           k=topk, alpha=alpha)
    out = jax.block_until_ready(out)

    ref = _reference(emb_weight, lin_weight, lin_bias, idx, k=topk, alpha=alpha)
    assert out.shape == (n_sel, n_sel) and out.dtype == jnp.float32
    assert jnp.allclose(out, ref, atol=1e-4, rtol=1e-4), "mismatch vs reference"
    print("KERNEL_OK")
</pallas_src>

<mosaic_0001>
module attributes {stable_mosaic.version = 11 : i64} {
  func.func @_nodevec_kernel(%arg0: i32, %arg1: memref<16x128xf32, #tpu.memory_space<vmem>>, %arg2: memref<128x128xf32, #tpu.memory_space<vmem>>, %arg3: memref<1x128xf32, #tpu.memory_space<vmem>>, %arg4: memref<16x128xf32, #tpu.memory_space<vmem>>) attributes {dimension_semantics = [#tpu.dimension_semantics<arbitrary>], iteration_bounds = array<i64: 1>, scalar_prefetch = 0 : i64, scratch_operands = 0 : i64, tpu.core_type = #tpu.core_type<tc>, window_params = [{pipeline_mode = #tpu.pipeline_mode<synchronous>, transform_indices = @transform_0, window_bounds = array<i64: 16, 128>}, {pipeline_mode = #tpu.pipeline_mode<synchronous>, transform_indices = @transform_1, window_bounds = array<i64: 128, 128>}, {pipeline_mode = #tpu.pipeline_mode<synchronous>, transform_indices = @transform_2, window_bounds = array<i64: 1, 128>}, {pipeline_mode = #tpu.pipeline_mode<synchronous>, transform_indices = @transform_3, window_bounds = array<i64: 16, 128>}]} {
    %c0 = arith.constant 0 : index
    %c0_0 = arith.constant 0 : index
    %0 = vector.load %arg1[%c0, %c0_0] : memref<16x128xf32, #tpu.memory_space<vmem>>, vector<16x128xf32>
    %c0_1 = arith.constant 0 : index
    %c0_2 = arith.constant 0 : index
    %1 = vector.load %arg2[%c0_1, %c0_2] : memref<128x128xf32, #tpu.memory_space<vmem>>, vector<128x128xf32>
    %cst = arith.constant dense<0.000000e+00> : vector<16x128xf32>
    %2 = tpu.matmul %0, %1, %cst {dimension_numbers = #tpu.dot_dimension_numbers<[1], [0], [0], [1], [0, 0, 1, 1], [], []>} : vector<16x128xf32>, vector<128x128xf32>, vector<16x128xf32> -> vector<16x128xf32>
    %c0_3 = arith.constant 0 : index
    %c0_4 = arith.constant 0 : index
    %3 = vector.load %arg3[%c0_3, %c0_4] : memref<1x128xf32, #tpu.memory_space<vmem>>, vector<1x128xf32>
    %4 = vector.broadcast %3 : vector<1x128xf32> to vector<16x128xf32>
    %5 = arith.addf %2, %4 : vector<16x128xf32>
    %cst_5 = arith.constant 3.000000e+00 : f32
    %6 = vector.broadcast %cst_5 : f32 to vector<16x128xf32>
    %7 = arith.mulf %6, %5 : vector<16x128xf32>
    %8 = math.tanh %7 : vector<16x128xf32>
    %9 = tpu.iota {dimensions = array<i32: 0>} : vector<16x1xi32>
    %c16_i32 = arith.constant 16 : i32
    %10 = vector.broadcast %c16_i32 : i32 to vector<16x1xi32>
    %11 = arith.cmpi slt, %9, %10 : vector<16x1xi32>
    %cst_6 = arith.constant 0.000000e+00 : f32
    %12 = vector.shape_cast %11 : vector<16x1xi1> to vector<16x1xi1>
    %13 = vector.broadcast %12 : vector<16x1xi1> to vector<16x128xi1>
    %14 = vector.broadcast %cst_6 : f32 to vector<16x128xf32>
    %15 = arith.select %13, %8, %14 : vector<16x128xi1>, vector<16x128xf32>
    %c0_7 = arith.constant 0 : index
    %c0_8 = arith.constant 0 : index
    %16 = vector.load %arg4[%c0_7, %c0_8] : memref<16x128xf32, #tpu.memory_space<vmem>>, vector<16x128xf32>
    tpu.vector_store %arg4[%c0_7, %c0_8], %15 {strides = array<i32>} : memref<16x128xf32, #tpu.memory_space<vmem>>, vector<16x128xf32>,
    return
  }
  func.func @transform_0(%arg0: i32) -> (i32, i32) {
    %c0_i32 = arith.constant 0 : i32
    %c0_i32_0 = arith.constant 0 : i32
    %c0_i32_1 = arith.constant 0 : i32
    return %c0_i32, %c0_i32_0 : i32, i32
  }
  func.func @transform_1(%arg0: i32) -> (i32, i32) {
    %c0_i32 = arith.constant 0 : i32
    %c0_i32_0 = arith.constant 0 : i32
    %c0_i32_1 = arith.constant 0 : i32
    return %c0_i32, %c0_i32_0 : i32, i32
  }
  func.func @transform_2(%arg0: i32) -> (i32, i32) {
    %c0_i32 = arith.constant 0 : i32
    %c0_i32_0 = arith.constant 0 : i32
    %c0_i32_1 = arith.constant 0 : i32
    return %c0_i32, %c0_i32_0 : i32, i32
  }
  func.func @transform_3(%arg0: i32) -> (i32, i32) {
    %c0_i32 = arith.constant 0 : i32
    %c0_i32_0 = arith.constant 0 : i32
    %c0_i32_1 = arith.constant 0 : i32
    return %c0_i32, %c0_i32_0 : i32, i32
  }
}

</mosaic_0001>

<llo_original>
// kernel: tpu_custom_call.1
$region0: #{tpu_custom_call.1}
  #allocation0 [shape = 'u32[]', space=smem, size = 0x4, offset = 0x4, fixed_abs, tag = 'smem constant byte address 0x4 - core index']
  #allocation1 [shape = 'u32[72,128]{1,0:T(1,128)}', space=vmem, size = 0x9000, scoped, tag = 'internal scratch']
  %s0 = inlined_call_operand.hbm [shape: f32[16,128], index: 0, kind: input, shape index: {}]
  %s1 = inlined_call_operand.hbm [shape: f32[128,128], index: 1, kind: input, shape index: {}]
  %s2 = inlined_call_operand.vmem [shape: f32[1,128], index: 2, kind: input, shape index: {}]
  %s3 = inlined_call_operand.hbm [shape: f32[16,128], index: 3, kind: output, shape index: {}]
  %s4 = sld [smem:[#allocation0]]
  $region30: #{tpu_custom_call.1} parent=0
    _
  %s6 = ssub.s32 1, %s4
  %s7 = scalar_select 0, %s6, %s4
  $region1: #{tpu_custom_call.1} parent=0
    #allocation2 [shape = 'u8[8192]{0}', space=vmem, size = 0x2000, scoped, tag = 'input window, operand 0, single buffered']
    #allocation3 [shape = 's32[1]{0}', space=sflag, size = 0x4, scoped, tag = 'scoped memory for tpu_custom_call.1']
    #allocation4 [shape = 's32[1]{0}', space=sflag, size = 0x4, scoped, tag = 'scoped memory for tpu_custom_call.1']
    #allocation5 [shape = 'u8[65536]{0}', space=vmem, size = 0x10000, scoped, tag = 'input window, operand 1, single buffered']
    #allocation6 [shape = 's32[1]{0}', space=sflag, size = 0x4, scoped, tag = 'scoped memory for tpu_custom_call.1']
    #allocation7 [shape = 'u8[8192]{0}', space=vmem, size = 0x2000, scoped, tag = 'output window, operand 0, single buffered']
    %8 = vsyncpa [#allocation3], 0
    %9 = vsyncpa [#allocation6], 0
    %10 = vsyncpa [#allocation4], 0
    // Predicated region
    $region2: #{tpu_custom_call.1} parent=1 // pred_check
      _
    $region3: #{tpu_custom_call.1} parent=1 // pred_check_branch
      %12 = sbr.rel (0) target = $region5
    $region4: #{tpu_custom_call.1} parent=1 // pred_region
      %14 = vsyncadd [#allocation3], 0
      %s15 = sshll.u32 %s0, 4
      %s16 = int_to_ptr.hbm [resolvable:$true] %s15
      %s17 = sshll.u32 [#allocation2], 4
      %s18 = int_to_ptr.vmem [resolvable:$true] %s17
      %23 = dma.hbm_to_vmem [thread:$0]  %s16, 256, %s18, [#allocation3], 128, 128, 8
    $region5: #{tpu_custom_call.1} parent=1 // pred_fallthru
      _
    // Predicated region
    $region6: #{tpu_custom_call.1} parent=1 // pred_check
      _
    $region7: #{tpu_custom_call.1} parent=1 // pred_check_branch
      %25 = sbr.rel (0) target = $region9
    $region8: #{tpu_custom_call.1} parent=1 // pred_region
      %27 = vsyncadd [#allocation6], 0
      %s28 = sshll.u32 %s1, 4
      %s29 = int_to_ptr.hbm [resolvable:$true] %s28
      %s30 = sshll.u32 [#allocation5], 4
      %s31 = int_to_ptr.vmem [resolvable:$true] %s30
      %36 = dma.hbm_to_vmem [thread:$0]  %s29, 2048, %s31, [#allocation6], 128, 128, 8
    $region9: #{tpu_custom_call.1} parent=1 // pred_fallthru
      _
    // Predicated region
    $region10: #{tpu_custom_call.1} parent=1 // pred_check
      _
    $region11: #{tpu_custom_call.1} parent=1 // pred_check_branch
      %38 = sbr.rel (0) target = $region13
    $region12: #{tpu_custom_call.1} parent=1 // pred_region
      _
    $region13: #{tpu_custom_call.1} parent=1 // pred_fallthru
      _
    // Predicated region
    $region14: #{tpu_custom_call.1} parent=1 // pred_check
      _
    $region15: #{tpu_custom_call.1} parent=1 // pred_check_branch
      %40 = sbr.rel (0) target = $region17
    $region16: #{tpu_custom_call.1} parent=1 // pred_region
      %42 = dma.done [#allocation3], 256
    $region17: #{tpu_custom_call.1} parent=1 // pred_fallthru
      _
    // Predicated region
    $region18: #{tpu_custom_call.1} parent=1 // pred_check
      _
    $region19: #{tpu_custom_call.1} parent=1 // pred_check_branch
      %44 = sbr.rel (0) target = $region21
    $region20: #{tpu_custom_call.1} parent=1 // pred_region
      %46 = dma.done [#allocation6], 2048
    $region21: #{tpu_custom_call.1} parent=1 // pred_fallthru
      _
    %v47 = vld [vmem:[#allocation2] sm:$0xff]
    %v48 = vld [vmem:[#allocation2 + $0x8] sm:$0xff]
    %v49 = vld [vmem:[#allocation5] sm:$0xff]
    %v50 = vld [vmem:[#allocation5 + $0x8] sm:$0xff]
    %v51 = vld [vmem:[#allocation5 + $0x10] sm:$0xff]
    %v52 = vld [vmem:[#allocation5 + $0x18] sm:$0xff]
    %v53 = vld [vmem:[#allocation5 + $0x20] sm:$0xff]
    %v54 = vld [vmem:[#allocation5 + $0x28] sm:$0xff]
    %v55 = vld [vmem:[#allocation5 + $0x30] sm:$0xff]
    %v56 = vld [vmem:[#allocation5 + $0x38] sm:$0xff]
    %v57 = vld [vmem:[#allocation5 + $0x40] sm:$0xff]
    %v58 = vld [vmem:[#allocation5 + $0x48] sm:$0xff]
    %v59 = vld [vmem:[#allocation5 + $0x50] sm:$0xff]
    %v60 = vld [vmem:[#allocation5 + $0x58] sm:$0xff]
    %v61 = vld [vmem:[#allocation5 + $0x60] sm:$0xff]
    %v62 = vld [vmem:[#allocation5 + $0x68] sm:$0xff]
    %v63 = vld [vmem:[#allocation5 + $0x70] sm:$0xff]
    %v64 = vld [vmem:[#allocation5 + $0x78] sm:$0xff]
    %v65 = vld [vmem:[%s2] sm:$0x1]
    %v67 = vperm.slane %v65, 0
    %69 = vmatpush.msra.mxu0 %v64
    %70 = vmatpush.msra.mxu0 %v63
    %71 = vmatpush.msra.mxu0 %v62
    %72 = vmatpush.msra.mxu0 %v61
    %73 = vmatpush.msra.mxu0 %v60
    %74 = vmatpush.msra.mxu0 %v59
    %75 = vmatpush.msra.mxu0 %v58
    %76 = vmatpush.msra.mxu0 %v57
    %77 = vmatpush.msra.mxu0 %v56
    %78 = vmatpush.msra.mxu0 %v55
    %79 = vmatpush.msra.mxu0 %v54
    %80 = vmatpush.msra.mxu0 %v53
    %81 = vmatpush.msra.mxu0 %v52
    %82 = vmatpush.msra.mxu0 %v51
    %83 = vmatpush.msra.mxu0 %v50
    %84 = vmatpush.msra.mxu0 %v49
    %85 = vmatmul.f32.gmra.mxu0 %v47
    %v86 = vpop.f32.mrf.mxu0
    %v87 = vadd.f32 %v67, %v86
    %88 = vmatmul.f32.gmra.mxu0 %v48
    %v89 = vpop.f32.mrf.mxu0
    %v90 = vadd.f32 %v67, %v89
    %91 = vdwg.mxu0
    %v92 = vmul.f32 %v87, 3.0
    %v93 = vmul.f32 %v90, 3.0
    %v94 = vtanh.pop %v92
    %v95 = vtanh.pop %v93
    %v96 = vlaneseq
    %v97 = vshrl.u32 %v96, 7
    %v98 = vadd.s32 %v97, 8
    %vm99 = vcmp.lt.s32.totalorder %v97, 16
    %vm100 = vcmp.lt.s32.totalorder %v98, 16
    %v101 = vsel %vm99, 1, 0
    %v102 = vsel %vm100, 1, 0
    %vm103 = vcmp.eq.s32.totalorder %v101, 1
    %vm104 = vcmp.eq.s32.totalorder %v102, 1
    %v105 = vsel %vm103, %v94, 0.0
    %v106 = vsel %vm104, %v95, 0.0
    %107 = vst [vmem:[#allocation7] sm:$0xff] %v105
    %108 = vst [vmem:[#allocation7 + $0x8] sm:$0xff] %v106
    // Predicated region
    $region22: #{tpu_custom_call.1} parent=1 // pred_check
      _
    $region23: #{tpu_custom_call.1} parent=1 // pred_check_branch
      %110 = sbr.rel (0) target = $region25
    $region24: #{tpu_custom_call.1} parent=1 // pred_region
      %112 = vsyncadd [#allocation4], 0
      %s113 = sshll.u32 [#allocation7], 4
      %s114 = int_to_ptr.vmem [resolvable:$true] %s113
      %s115 = sshll.u32 %s3, 4
      %s116 = int_to_ptr.hbm [resolvable:$true] %s115
      %121 = dma.vmem_to_hbm [thread:$0]  %s114, 256, %s116, [#allocation4], 128, 128, 8
    $region25: #{tpu_custom_call.1} parent=1 // pred_fallthru
      _
    // Predicated region
    $region26: #{tpu_custom_call.1} parent=1 // pred_check
      _
    $region27: #{tpu_custom_call.1} parent=1 // pred_check_branch
      %123 = sbr.rel (0) target = $region29
    $region28: #{tpu_custom_call.1} parent=1 // pred_region
      %125 = dma.done [#allocation4], 256
    $region29: #{tpu_custom_call.1} parent=1 // pred_fallthru
      _
    %126 = vsyncpa [#allocation3], 1
    %127 = vsyncpa [#allocation6], 1
    %128 = vsyncpa [#allocation4], 1

</llo_original>
